<compile_context>
chip_gen: v6e
topology: v6e:2x2x1
jax: 0.10.0
libtpu: 0.0.40
codegen_flags: <defaults>
</compile_context>

<pallas_src>
import functools

import jax
import jax.numpy as jnp
from jax.experimental import pallas as pl
from jax.experimental.pallas import tpu as pltpu

BN_EPS = 1e-5          # nn.BatchNorm1d default eps
LANE = 128             # TPU lane width; pad feature dims to multiples of this


def _round_up(n, m):
    return ((n + m - 1) // m) * m


def _fused_mlp_kernel(x_ref, vec_ref, *rest, bn_flags, out_pads):
    """Whole NeuralNet forward in a single kernel invocation.

    rest = (w_ref_0, ..., w_ref_{L-1}, out_ref)
    vec_ref is a packed (2*L, max_out_pad) f32 array:
        row 2*i   : gamma (BN layers)            [zeros otherwise / in padded lanes]
        row 2*i+1 : beta (BN layers) or bias     [zeros in padded lanes]

    All intermediate activations live in VMEM / vregs between layers.  Padded
    feature columns are all-zero by construction and stay zero through BN
    (gamma/beta are zero there) and ReLU, so they never pollute real lanes.
    """
    w_refs = rest[:-1]
    out_ref = rest[-1]

    x = x_ref[...]                                        # (B, in_pad) f32
    inv_b = 1.0 / x.shape[0]

    for i, (apply_bn, out_pad) in enumerate(zip(bn_flags, out_pads)):
        w = w_refs[i][...]                                # (in_pad_i, out_pad_i)
        # MXU matmul: bf16 (or f32) inputs, f32 accumulation.
        y = jnp.dot(x.astype(w.dtype), w, preferred_element_type=jnp.float32)

        if apply_bn:
            gamma = vec_ref[2 * i:2 * i + 1, :out_pad]    # (1, out_pad) f32
            beta = vec_ref[2 * i + 1:2 * i + 2, :out_pad]
            # Training-mode BatchNorm1d (biased batch variance), single-pass
            # statistics, folded into one scale/shift.  The Linear bias is
            # intentionally omitted on BN layers: mean subtraction cancels it.
            s1 = jnp.sum(y, axis=0, keepdims=True)
            s2 = jnp.sum(y * y, axis=0, keepdims=True)
            mean = s1 * inv_b
            var = jnp.maximum(s2 * inv_b - mean * mean, 0.0)
            scale = gamma * jax.lax.rsqrt(var + BN_EPS)
            shift = beta - mean * scale
            y = y * scale + shift
        else:
            bias = vec_ref[2 * i + 1:2 * i + 2, :out_pad]  # (1, out_pad) f32
            y = y + bias

        x = jnp.maximum(y, 0.0)                           # ReLU

    out_ref[...] = x


@functools.partial(
    jax.jit,
    static_argnames=("bn_flags", "out_pads", "in_true", "in_pad", "out_true"))
def _forward_impl(x, vec_pack, *weights, bn_flags, out_pads, in_true, in_pad,
                  out_true):
    """Jitted: pad input -> fused Pallas kernel -> slice output (all fused)."""
    B = x.shape[0]
    # Zero-pad input features to a lane-dense width (fuses into this executable).
    x_pad = jnp.zeros((B, in_pad), jnp.float32).at[:, :in_true].set(
        x.astype(jnp.float32))

    kernel = functools.partial(_fused_mlp_kernel, bn_flags=bn_flags,
                               out_pads=out_pads)
    vmem_spec = pl.BlockSpec(memory_space=pltpu.MemorySpace.VMEM)

    out_padded = pl.pallas_call(
        kernel,
        out_shape=jax.ShapeDtypeStruct((B, out_pads[-1]), jnp.float32),
        in_specs=[vmem_spec] * (2 + len(weights)),
        out_specs=vmem_spec,
    )(x_pad, vec_pack, *weights)

    return out_padded[:, :out_true]


def init_neural_net_params(key, input_size, output_size,
                           layer_sizes=(300, 150, 50), batch_norm=True,
                           matmul_dtype=jnp.bfloat16):
    """Parameter init mirroring nn.Linear / nn.BatchNorm1d, pre-padded, pre-transposed
    and pre-packed for the fused kernel.

    Weights are stored as (in_pad, out_pad) in `matmul_dtype` (default bf16: the MXU
    is bf16-native on every generation; accumulation stays f32 inside the kernel).
    gamma/beta/bias vectors are packed into a single (2*L, max_out_pad) f32 array.
    """
    sizes = [input_size] + list(layer_sizes) + [output_size]
    n_layers = len(sizes) - 1
    if isinstance(batch_norm, bool):
        bn_flags = tuple(batch_norm for _ in range(n_layers))
    else:
        bn_flags = tuple(bool(b) for b in batch_norm)
    assert len(bn_flags) == n_layers

    in_pads = [_round_up(s, LANE) for s in sizes[:-1]]
    out_pads = [_round_up(s, LANE) for s in sizes[1:]]
    max_out_pad = max(out_pads)

    weights = []
    vec_pack = jnp.zeros((2 * n_layers, max_out_pad), jnp.float32)
    for i, ((fin, fout), apply_bn) in enumerate(
            zip(zip(sizes[:-1], sizes[1:]), bn_flags)):
        key, kw, kb = jax.random.split(key, 3)
        bound = 1.0 / float(fin) ** 0.5
        w = jax.random.uniform(kw, (fout, fin), jnp.float32, -bound, bound)
        b = jax.random.uniform(kb, (fout,), jnp.float32, -bound, bound)

        fin_p, fout_p = in_pads[i], out_pads[i]
        w_t = jnp.zeros((fin_p, fout_p), jnp.float32).at[:fin, :fout].set(w.T)
        weights.append(w_t.astype(matmul_dtype))

        if apply_bn:
            # BatchNorm1d weight (gamma) / bias (beta); Linear bias is cancelled
            # exactly by the batch-mean subtraction in training-mode BN.
            vec_pack = vec_pack.at[2 * i, :fout].set(jnp.ones((fout,), jnp.float32))
            vec_pack = vec_pack.at[2 * i + 1, :fout].set(jnp.zeros((fout,),
                                                                   jnp.float32))
        else:
            vec_pack = vec_pack.at[2 * i + 1, :fout].set(b)

    return {
        "weights": tuple(weights),
        "vec_pack": vec_pack,
        "bn_flags": bn_flags,
        "out_pads": tuple(out_pads),
        "in_true": int(input_size),
        "in_pad": int(in_pads[0]),
        "out_true": int(output_size),
    }


def neural_net_forward(params, x):
    """NeuralNet.forward as a single fused, jitted, grid-less Pallas call."""
    assert x.shape[1] == params["in_true"], x.shape
    return _forward_impl(
        x, params["vec_pack"], *params["weights"],
        bn_flags=params["bn_flags"], out_pads=params["out_pads"],
        in_true=params["in_true"], in_pad=params["in_pad"],
        out_true=params["out_true"])


if __name__ == "__main__":
    key = jax.random.PRNGKey(0)
    kx, kp = jax.random.split(key)

    batch = 8
    input_size = 32
    output_size = 16

    x = jax.random.normal(kx, (batch, input_size), jnp.float32)
    # TODO(synk): BatchNorm1d running_mean/running_var (eval-mode stats) are not
    # tracked; the kernel implements the module's default training-mode forward.
    params = init_neural_net_params(kp, input_size, output_size,
                                    layer_sizes=(300, 150, 50), batch_norm=True,
                                    matmul_dtype=jnp.bfloat16)

    out = neural_net_forward(params, x)
    out = jax.block_until_ready(out)

    assert out.shape == (batch, output_size), out.shape
    assert bool(jnp.all(jnp.isfinite(out)))
    assert bool(jnp.all(out >= 0.0))                  # ReLU output is non-negative
    assert float(jnp.max(jnp.abs(out))) > 0.0         # not degenerate all-zeros
    print("KERNEL_OK")
</pallas_src>

<mosaic_0001>
module attributes {stable_mosaic.version = 11 : i64} {
  func.func @_fused_mlp_kernel(%arg0: memref<8x128xf32, #tpu.memory_space<vmem>>, %arg1: memref<8x384xf32, #tpu.memory_space<vmem>>, %arg2: memref<128x384xbf16, #tpu.memory_space<vmem>>, %arg3: memref<384x256xbf16, #tpu.memory_space<vmem>>, %arg4: memref<256x128xbf16, #tpu.memory_space<vmem>>, %arg5: memref<128x128xbf16, #tpu.memory_space<vmem>>, %arg6: memref<8x128xf32, #tpu.memory_space<vmem>>) attributes {dimension_semantics = [], scalar_prefetch = 0 : i64, scratch_operands = 0 : i64, tpu.core_type = #tpu.core_type<tc>} {
    %c0 = arith.constant 0 : index
    %c0_0 = arith.constant 0 : index
    %0 = vector.load %arg0[%c0, %c0_0] : memref<8x128xf32, #tpu.memory_space<vmem>>, vector<8x128xf32>
    %c0_1 = arith.constant 0 : index
    %c0_2 = arith.constant 0 : index
    %1 = vector.load %arg2[%c0_1, %c0_2] : memref<128x384xbf16, #tpu.memory_space<vmem>>, vector<128x384xbf16>
    %2 = arith.truncf %0 : vector<8x128xf32> to vector<8x128xbf16>
    %cst = arith.constant dense<0.000000e+00> : vector<8x384xf32>
    %3 = tpu.matmul %2, %1, %cst {dimension_numbers = #tpu.dot_dimension_numbers<[1], [0], [0], [1], [0, 0, 1, 1], [], []>} : vector<8x128xbf16>, vector<128x384xbf16>, vector<8x384xf32> -> vector<8x384xf32>
    %c0_3 = arith.constant 0 : index
    %c0_4 = arith.constant 0 : index
    %4 = vector.load %arg1[%c0_3, %c0_4] : memref<8x384xf32, #tpu.memory_space<vmem>>, vector<1x384xf32>
    %c1 = arith.constant 1 : index
    %c0_5 = arith.constant 0 : index
    %5 = vector.load %arg1[%c1, %c0_5] : memref<8x384xf32, #tpu.memory_space<vmem>>, vector<1x384xf32>
    %cst_6 = arith.constant dense<0.000000e+00> : vector<384xf32>
    %6 = vector.multi_reduction <add>, %3, %cst_6 [0] : vector<8x384xf32> to vector<384xf32>
    %7 = vector.shape_cast %6 : vector<384xf32> to vector<1x384xf32>
    %8 = arith.mulf %3, %3 : vector<8x384xf32>
    %cst_7 = arith.constant dense<0.000000e+00> : vector<384xf32>
    %9 = vector.multi_reduction <add>, %8, %cst_7 [0] : vector<8x384xf32> to vector<384xf32>
    %10 = vector.shape_cast %9 : vector<384xf32> to vector<1x384xf32>
    %cst_8 = arith.constant 1.250000e-01 : f32
    %11 = vector.broadcast %cst_8 : f32 to vector<1x384xf32>
    %12 = arith.mulf %7, %11 : vector<1x384xf32>
    %cst_9 = arith.constant 1.250000e-01 : f32
    %13 = vector.broadcast %cst_9 : f32 to vector<1x384xf32>
    %14 = arith.mulf %10, %13 : vector<1x384xf32>
    %15 = arith.mulf %12, %12 : vector<1x384xf32>
    %16 = arith.subf %14, %15 : vector<1x384xf32>
    %cst_10 = arith.constant 0.000000e+00 : f32
    %17 = vector.broadcast %cst_10 : f32 to vector<1x384xf32>
    %18 = arith.maximumf %16, %17 : vector<1x384xf32>
    %cst_11 = arith.constant 9.99999974E-6 : f32
    %19 = vector.broadcast %cst_11 : f32 to vector<1x384xf32>
    %20 = arith.addf %18, %19 : vector<1x384xf32>
    %21 = math.rsqrt %20 : vector<1x384xf32>
    %22 = arith.mulf %4, %21 : vector<1x384xf32>
    %23 = arith.mulf %12, %22 : vector<1x384xf32>
    %24 = arith.subf %5, %23 : vector<1x384xf32>
    %25 = vector.broadcast %22 : vector<1x384xf32> to vector<8x384xf32>
    %26 = arith.mulf %3, %25 : vector<8x384xf32>
    %27 = vector.broadcast %24 : vector<1x384xf32> to vector<8x384xf32>
    %28 = arith.addf %26, %27 : vector<8x384xf32>
    %cst_12 = arith.constant 0.000000e+00 : f32
    %29 = vector.broadcast %cst_12 : f32 to vector<8x384xf32>
    %30 = arith.maximumf %28, %29 : vector<8x384xf32>
    %c0_13 = arith.constant 0 : index
    %c0_14 = arith.constant 0 : index
    %31 = vector.load %arg3[%c0_13, %c0_14] : memref<384x256xbf16, #tpu.memory_space<vmem>>, vector<384x256xbf16>
    %32 = arith.truncf %30 : vector<8x384xf32> to vector<8x384xbf16>
    %cst_15 = arith.constant dense<0.000000e+00> : vector<8x256xf32>
    %33 = tpu.matmul %32, %31, %cst_15 {dimension_numbers = #tpu.dot_dimension_numbers<[1], [0], [0], [1], [0, 0, 1, 1], [], []>} : vector<8x384xbf16>, vector<384x256xbf16>, vector<8x256xf32> -> vector<8x256xf32>
    %c2 = arith.constant 2 : index
    %c0_16 = arith.constant 0 : index
    %34 = vector.load %arg1[%c2, %c0_16] : memref<8x384xf32, #tpu.memory_space<vmem>>, vector<1x256xf32>
    %c3 = arith.constant 3 : index
    %c0_17 = arith.constant 0 : index
    %35 = vector.load %arg1[%c3, %c0_17] : memref<8x384xf32, #tpu.memory_space<vmem>>, vector<1x256xf32>
    %cst_18 = arith.constant dense<0.000000e+00> : vector<256xf32>
    %36 = vector.multi_reduction <add>, %33, %cst_18 [0] : vector<8x256xf32> to vector<256xf32>
    %37 = vector.shape_cast %36 : vector<256xf32> to vector<1x256xf32>
    %38 = arith.mulf %33, %33 : vector<8x256xf32>
    %cst_19 = arith.constant dense<0.000000e+00> : vector<256xf32>
    %39 = vector.multi_reduction <add>, %38, %cst_19 [0] : vector<8x256xf32> to vector<256xf32>
    %40 = vector.shape_cast %39 : vector<256xf32> to vector<1x256xf32>
    %cst_20 = arith.constant 1.250000e-01 : f32
    %41 = vector.broadcast %cst_20 : f32 to vector<1x256xf32>
    %42 = arith.mulf %37, %41 : vector<1x256xf32>
    %cst_21 = arith.constant 1.250000e-01 : f32
    %43 = vector.broadcast %cst_21 : f32 to vector<1x256xf32>
    %44 = arith.mulf %40, %43 : vector<1x256xf32>
    %45 = arith.mulf %42, %42 : vector<1x256xf32>
    %46 = arith.subf %44, %45 : vector<1x256xf32>
    %cst_22 = arith.constant 0.000000e+00 : f32
    %47 = vector.broadcast %cst_22 : f32 to vector<1x256xf32>
    %48 = arith.maximumf %46, %47 : vector<1x256xf32>
    %cst_23 = arith.constant 9.99999974E-6 : f32
    %49 = vector.broadcast %cst_23 : f32 to vector<1x256xf32>
    %50 = arith.addf %48, %49 : vector<1x256xf32>
    %51 = math.rsqrt %50 : vector<1x256xf32>
    %52 = arith.mulf %34, %51 : vector<1x256xf32>
    %53 = arith.mulf %42, %52 : vector<1x256xf32>
    %54 = arith.subf %35, %53 : vector<1x256xf32>
    %55 = vector.broadcast %52 : vector<1x256xf32> to vector<8x256xf32>
    %56 = arith.mulf %33, %55 : vector<8x256xf32>
    %57 = vector.broadcast %54 : vector<1x256xf32> to vector<8x256xf32>
    %58 = arith.addf %56, %57 : vector<8x256xf32>
    %cst_24 = arith.constant 0.000000e+00 : f32
    %59 = vector.broadcast %cst_24 : f32 to vector<8x256xf32>
    %60 = arith.maximumf %58, %59 : vector<8x256xf32>
    %c0_25 = arith.constant 0 : index
    %c0_26 = arith.constant 0 : index
    %61 = vector.load %arg4[%c0_25, %c0_26] : memref<256x128xbf16, #tpu.memory_space<vmem>>, vector<256x128xbf16>
    %62 = arith.truncf %60 : vector<8x256xf32> to vector<8x256xbf16>
    %cst_27 = arith.constant dense<0.000000e+00> : vector<8x128xf32>
    %63 = tpu.matmul %62, %61, %cst_27 {dimension_numbers = #tpu.dot_dimension_numbers<[1], [0], [0], [1], [0, 0, 1, 1], [], []>} : vector<8x256xbf16>, vector<256x128xbf16>, vector<8x128xf32> -> vector<8x128xf32>
    %c4 = arith.constant 4 : index
    %c0_28 = arith.constant 0 : index
    %64 = vector.load %arg1[%c4, %c0_28] : memref<8x384xf32, #tpu.memory_space<vmem>>, vector<1x128xf32>
    %c5 = arith.constant 5 : index
    %c0_29 = arith.constant 0 : index
    %65 = vector.load %arg1[%c5, %c0_29] : memref<8x384xf32, #tpu.memory_space<vmem>>, vector<1x128xf32>
    %cst_30 = arith.constant dense<0.000000e+00> : vector<128xf32>
    %66 = vector.multi_reduction <add>, %63, %cst_30 [0] : vector<8x128xf32> to vector<128xf32>
    %67 = vector.shape_cast %66 : vector<128xf32> to vector<1x128xf32>
    %68 = arith.mulf %63, %63 : vector<8x128xf32>
    %cst_31 = arith.constant dense<0.000000e+00> : vector<128xf32>
    %69 = vector.multi_reduction <add>, %68, %cst_31 [0] : vector<8x128xf32> to vector<128xf32>
    %70 = vector.shape_cast %69 : vector<128xf32> to vector<1x128xf32>
    %cst_32 = arith.constant 1.250000e-01 : f32
    %71 = vector.broadcast %cst_32 : f32 to vector<1x128xf32>
    %72 = arith.mulf %67, %71 : vector<1x128xf32>
    %cst_33 = arith.constant 1.250000e-01 : f32
    %73 = vector.broadcast %cst_33 : f32 to vector<1x128xf32>
    %74 = arith.mulf %70, %73 : vector<1x128xf32>
    %75 = arith.mulf %72, %72 : vector<1x128xf32>
    %76 = arith.subf %74, %75 : vector<1x128xf32>
    %cst_34 = arith.constant 0.000000e+00 : f32
    %77 = vector.broadcast %cst_34 : f32 to vector<1x128xf32>
    %78 = arith.maximumf %76, %77 : vector<1x128xf32>
    %cst_35 = arith.constant 9.99999974E-6 : f32
    %79 = vector.broadcast %cst_35 : f32 to vector<1x128xf32>
    %80 = arith.addf %78, %79 : vector<1x128xf32>
    %81 = math.rsqrt %80 : vector<1x128xf32>
    %82 = arith.mulf %64, %81 : vector<1x128xf32>
    %83 = arith.mulf %72, %82 : vector<1x128xf32>
    %84 = arith.subf %65, %83 : vector<1x128xf32>
    %85 = vector.broadcast %82 : vector<1x128xf32> to vector<8x128xf32>
    %86 = arith.mulf %63, %85 : vector<8x128xf32>
    %87 = vector.broadcast %84 : vector<1x128xf32> to vector<8x128xf32>
    %88 = arith.addf %86, %87 : vector<8x128xf32>
    %cst_36 = arith.constant 0.000000e+00 : f32
    %89 = vector.broadcast %cst_36 : f32 to vector<8x128xf32>
    %90 = arith.maximumf %88, %89 : vector<8x128xf32>
    %c0_37 = arith.constant 0 : index
    %c0_38 = arith.constant 0 : index
    %91 = vector.load %arg5[%c0_37, %c0_38] : memref<128x128xbf16, #tpu.memory_space<vmem>>, vector<128x128xbf16>
    %92 = arith.truncf %90 : vector<8x128xf32> to vector<8x128xbf16>
    %cst_39 = arith.constant dense<0.000000e+00> : vector<8x128xf32>
    %93 = tpu.matmul %92, %91, %cst_39 {dimension_numbers = #tpu.dot_dimension_numbers<[1], [0], [0], [1], [0, 0, 1, 1], [], []>} : vector<8x128xbf16>, vector<128x128xbf16>, vector<8x128xf32> -> vector<8x128xf32>
    %c6 = arith.constant 6 : index
    %c0_40 = arith.constant 0 : index
    %94 = vector.load %arg1[%c6, %c0_40] : memref<8x384xf32, #tpu.memory_space<vmem>>, vector<1x128xf32>
    %c7 = arith.constant 7 : index
    %c0_41 = arith.constant 0 : index
    %95 = vector.load %arg1[%c7, %c0_41] : memref<8x384xf32, #tpu.memory_space<vmem>>, vector<1x128xf32>
    %cst_42 = arith.constant dense<0.000000e+00> : vector<128xf32>
    %96 = vector.multi_reduction <add>, %93, %cst_42 [0] : vector<8x128xf32> to vector<128xf32>
    %97 = vector.shape_cast %96 : vector<128xf32> to vector<1x128xf32>
    %98 = arith.mulf %93, %93 : vector<8x128xf32>
    %cst_43 = arith.constant dense<0.000000e+00> : vector<128xf32>
    %99 = vector.multi_reduction <add>, %98, %cst_43 [0] : vector<8x128xf32> to vector<128xf32>
    %100 = vector.shape_cast %99 : vector<128xf32> to vector<1x128xf32>
    %cst_44 = arith.constant 1.250000e-01 : f32
    %101 = vector.broadcast %cst_44 : f32 to vector<1x128xf32>
    %102 = arith.mulf %97, %101 : vector<1x128xf32>
    %cst_45 = arith.constant 1.250000e-01 : f32
    %103 = vector.broadcast %cst_45 : f32 to vector<1x128xf32>
    %104 = arith.mulf %100, %103 : vector<1x128xf32>
    %105 = arith.mulf %102, %102 : vector<1x128xf32>
    %106 = arith.subf %104, %105 : vector<1x128xf32>
    %cst_46 = arith.constant 0.000000e+00 : f32
    %107 = vector.broadcast %cst_46 : f32 to vector<1x128xf32>
    %108 = arith.maximumf %106, %107 : vector<1x128xf32>
    %cst_47 = arith.constant 9.99999974E-6 : f32
    %109 = vector.broadcast %cst_47 : f32 to vector<1x128xf32>
    %110 = arith.addf %108, %109 : vector<1x128xf32>
    %111 = math.rsqrt %110 : vector<1x128xf32>
    %112 = arith.mulf %94, %111 : vector<1x128xf32>
    %113 = arith.mulf %102, %112 : vector<1x128xf32>
    %114 = arith.subf %95, %113 : vector<1x128xf32>
    %115 = vector.broadcast %112 : vector<1x128xf32> to vector<8x128xf32>
    %116 = arith.mulf %93, %115 : vector<8x128xf32>
    %117 = vector.broadcast %114 : vector<1x128xf32> to vector<8x128xf32>
    %118 = arith.addf %116, %117 : vector<8x128xf32>
    %cst_48 = arith.constant 0.000000e+00 : f32
    %119 = vector.broadcast %cst_48 : f32 to vector<8x128xf32>
    %120 = arith.maximumf %118, %119 : vector<8x128xf32>
    %c0_49 = arith.constant 0 : index
    %c0_50 = arith.constant 0 : index
    %121 = vector.load %arg6[%c0_49, %c0_50] : memref<8x128xf32, #tpu.memory_space<vmem>>, vector<8x128xf32>
    tpu.vector_store %arg6[%c0_49, %c0_50], %120 {strides = array<i32>} : memref<8x128xf32, #tpu.memory_space<vmem>>, vector<8x128xf32>,
    return
  }
}

</mosaic_0001>

<llo_original>
// kernel: _forward_impl.1
$region0: #{_forward_impl.1}
  #allocation0 [shape = 'u32[]', space=smem, size = 0x4, offset = 0x4, fixed_abs, tag = 'smem constant byte address 0x4 - core index']
  #allocation1 [shape = 'u32[144,128]{1,0:T(1,128)}', space=vmem, size = 0x12000, scoped, tag = 'internal scratch']
  %s0 = inlined_call_operand.vmem [shape: f32[8,128], index: 0, kind: input, shape index: {}]
  %s1 = inlined_call_operand.vmem [shape: f32[8,384], index: 1, kind: input, shape index: {}]
  %s2 = inlined_call_operand.hbm [shape: bf16[128,384], index: 2, kind: input, shape index: {}]
  %s3 = inlined_call_operand.hbm [shape: bf16[384,256], index: 3, kind: input, shape index: {}]
  %s4 = inlined_call_operand.hbm [shape: bf16[256,128], index: 4, kind: input, shape index: {}]
  %s5 = inlined_call_operand.hbm [shape: bf16[128,128], index: 5, kind: input, shape index: {}]
  %s6 = inlined_call_operand.hbm [shape: f32[8,128], index: 6, kind: output, shape index: {}]
  %s7 = sld [smem:[#allocation0]]
  $region50: #{_forward_impl.1} parent=0
    _
  %s9 = ssub.s32 1, %s7
  %s10 = scalar_select 0, %s9, %s7
  $region1: #{_forward_impl.1} parent=0
    #allocation2 [shape = 'u8[98304]{0}', space=vmem, size = 0x18000, scoped, tag = 'input window, operand 2, single buffered']
    #allocation3 [shape = 's32[1]{0}', space=sflag, size = 0x4, scoped, tag = 'scoped memory for _forward_impl.1']
    #allocation4 [shape = 's32[1]{0}', space=sflag, size = 0x4, scoped, tag = 'scoped memory for _forward_impl.1']
    #allocation5 [shape = 'u8[196608]{0}', space=vmem, size = 0x30000, scoped, tag = 'input window, operand 3, single buffered']
    #allocation6 [shape = 's32[1]{0}', space=sflag, size = 0x4, scoped, tag = 'scoped memory for _forward_impl.1']
    #allocation7 [shape = 'u8[65536]{0}', space=vmem, size = 0x10000, scoped, tag = 'input window, operand 4, single buffered']
    #allocation8 [shape = 'u8[32768]{0}', space=vmem, size = 0x8000, scoped, tag = 'input window, operand 5, single buffered']
    #allocation9 [shape = 's32[1]{0}', space=sflag, size = 0x4, scoped, tag = 'scoped memory for _forward_impl.1']
    #allocation10 [shape = 'u8[4096]{0}', space=vmem, size = 0x1000, scoped, tag = 'output window, operand 0, single buffered']
    %11 = vsyncpa [#allocation3], 0
    %12 = vsyncpa [#allocation6], 0
    %13 = vsyncpa [#allocation9], 0
    %14 = vsyncpa [#allocation4], 0
    // Predicated region
    $region2: #{_forward_impl.1} parent=1 // pred_check
      _
    $region3: #{_forward_impl.1} parent=1 // pred_check_branch
      %16 = sbr.rel (0) target = $region5
    $region4: #{_forward_impl.1} parent=1 // pred_region
      _
    $region5: #{_forward_impl.1} parent=1 // pred_fallthru
      _
    // Predicated region
    $region6: #{_forward_impl.1} parent=1 // pred_check
      _
    $region7: #{_forward_impl.1} parent=1 // pred_check_branch
      %18 = sbr.rel (0) target = $region9
    $region8: #{_forward_impl.1} parent=1 // pred_region
      _
    $region9: #{_forward_impl.1} parent=1 // pred_fallthru
      _
    // Predicated region
    $region10: #{_forward_impl.1} parent=1 // pred_check
      _
    $region11: #{_forward_impl.1} parent=1 // pred_check_branch
      %20 = sbr.rel (0) target = $region13
    $region12: #{_forward_impl.1} parent=1 // pred_region
      %s22 = ssub.s32 3072, 3072
      %23 = vsyncadd [#allocation3], %s22
      %s24 = sshll.u32 [#allocation2], 4
      %s25 = int_to_ptr.vmem [resolvable:$true] %s24
      %30 = dma.hbm_to_vmem [thread:$0]  %s2, 3072, %s25, [#allocation3], 192, 192, 12
    $region13: #{_forward_impl.1} parent=1 // pred_fallthru
      _
    // Predicated region
    $region14: #{_forward_impl.1} parent=1 // pred_check
      _
    $region15: #{_forward_impl.1} parent=1 // pred_check_branch
      %32 = sbr.rel (0) target = $region17
    $region16: #{_forward_impl.1} parent=1 // pred_region
      %s34 = ssub.s32 6144, 6144
      %35 = vsyncadd [#allocation6], %s34
      %s36 = sshll.u32 [#allocation5], 4
      %s37 = int_to_ptr.vmem [resolvable:$true] %s36
      %42 = dma.hbm_to_vmem [thread:$0]  %s3, 6144, %s37, [#allocation6], 128, 128, 8
    $region17: #{_forward_impl.1} parent=1 // pred_fallthru
      _
    // Predicated region
    $region18: #{_forward_impl.1} parent=1 // pred_check
      _
    $region19: #{_forward_impl.1} parent=1 // pred_check_branch
      %44 = sbr.rel (0) target = $region21
    $region20: #{_forward_impl.1} parent=1 // pred_region
      %s46 = ssub.s32 2048, 2048
      %47 = vsyncadd [#allocation6], %s46
      %s48 = sshll.u32 [#allocation7], 4
      %s49 = int_to_ptr.vmem [resolvable:$true] %s48
      %54 = dma.hbm_to_vmem [thread:$0]  %s4, 2048, %s49, [#allocation6], 64, 64, 4
    $region21: #{_forward_impl.1} parent=1 // pred_fallthru
      _
    // Predicated region
    $region22: #{_forward_impl.1} parent=1 // pred_check
      _
    $region23: #{_forward_impl.1} parent=1 // pred_check_branch
      %56 = sbr.rel (0) target = $region25
    $region24: #{_forward_impl.1} parent=1 // pred_region
      %s58 = ssub.s32 1024, 1024
      %59 = vsyncadd [#allocation9], %s58
      %s60 = sshll.u32 [#allocation8], 4
      %s61 = int_to_ptr.vmem [resolvable:$true] %s60
      %66 = dma.hbm_to_vmem [thread:$0]  %s5, 1024, %s61, [#allocation9], 64, 64, 4
    $region25: #{_forward_impl.1} parent=1 // pred_fallthru
      _
    // Predicated region
    $region26: #{_forward_impl.1} parent=1 // pred_check
      _
    $region27: #{_forward_impl.1} parent=1 // pred_check_branch
      %68 = sbr.rel (0) target = $region29
    $region28: #{_forward_impl.1} parent=1 // pred_region
      %69 = dma.done [#allocation3], 3072
    $region29: #{_forward_impl.1} parent=1 // pred_fallthru
      _
    // Predicated region
    $region30: #{_forward_impl.1} parent=1 // pred_check
      _
    $region31: #{_forward_impl.1} parent=1 // pred_check_branch
      %71 = sbr.rel (0) target = $region33
    $region32: #{_forward_impl.1} parent=1 // pred_region
      %72 = dma.done [#allocation6], 6144
    $region33: #{_forward_impl.1} parent=1 // pred_fallthru
      _
    // Predicated region
    $region34: #{_forward_impl.1} parent=1 // pred_check
      _
    $region35: #{_forward_impl.1} parent=1 // pred_check_branch
      %74 = sbr.rel (0) target = $region37
    $region36: #{_forward_impl.1} parent=1 // pred_region
      %75 = dma.done [#allocation6], 2048
    $region37: #{_forward_impl.1} parent=1 // pred_fallthru
      _
    // Predicated region
    $region38: #{_forward_impl.1} parent=1 // pred_check
      _
    $region39: #{_forward_impl.1} parent=1 // pred_check_branch
      %77 = sbr.rel (0) target = $region41
    $region40: #{_forward_impl.1} parent=1 // pred_region
      %78 = dma.done [#allocation9], 1024
    $region41: #{_forward_impl.1} parent=1 // pred_fallthru
      _
    %v80 = vld [vmem:[%s0] sm:$0xff]
    %v81 = vld [vmem:[#allocation2] sm:$0xff]
    %v82 = vld [vmem:[#allocation2 + $0x8] sm:$0xf]
    %v83 = vld [vmem:[#allocation2 + $0xc] sm:$0xff]
    %v84 = vld [vmem:[#allocation2 + $0x14] sm:$0xf]
    %v85 = vld [vmem:[#allocation2 + $0x18] sm:$0xff]
    %v86 = vld [vmem:[#allocation2 + $0x20] sm:$0xf]
    %v87 = vld [vmem:[#allocation2 + $0x24] sm:$0xff]
    %v88 = vld [vmem:[#allocation2 + $0x2c] sm:$0xf]
    %v89 = vld [vmem:[#allocation2 + $0x30] sm:$0xff]
    %v90 = vld [vmem:[#allocation2 + $0x38] sm:$0xf]
    %v91 = vld [vmem:[#allocation2 + $0x3c] sm:$0xff]
    %v92 = vld [vmem:[#allocation2 + $0x44] sm:$0xf]
    %v93 = vld [vmem:[#allocation2 + $0x48] sm:$0xff]
    %v94 = vld [vmem:[#allocation2 + $0x50] sm:$0xf]
    %v95 = vld [vmem:[#allocation2 + $0x54] sm:$0xff]
    %v96 = vld [vmem:[#allocation2 + $0x5c] sm:$0xf]
    %v97 = vld [vmem:[#allocation2 + $0x60] sm:$0xff]
    %v98 = vld [vmem:[#allocation2 + $0x68] sm:$0xf]
    %v99 = vld [vmem:[#allocation2 + $0x6c] sm:$0xff]
    %v100 = vld [vmem:[#allocation2 + $0x74] sm:$0xf]
    %v101 = vld [vmem:[#allocation2 + $0x78] sm:$0xff]
    %v102 = vld [vmem:[#allocation2 + $0x80] sm:$0xf]
    %v103 = vld [vmem:[#allocation2 + $0x84] sm:$0xff]
    %v104 = vld [vmem:[#allocation2 + $0x8c] sm:$0xf]
    %v105 = vld [vmem:[#allocation2 + $0x90] sm:$0xff]
    %v106 = vld [vmem:[#allocation2 + $0x98] sm:$0xf]
    %v107 = vld [vmem:[#allocation2 + $0x9c] sm:$0xff]
    %v108 = vld [vmem:[#allocation2 + $0xa4] sm:$0xf]
    %v109 = vld [vmem:[#allocation2 + $0xa8] sm:$0xff]
    %v110 = vld [vmem:[#allocation2 + $0xb0] sm:$0xf]
    %v111 = vld [vmem:[#allocation2 + $0xb4] sm:$0xff]
    %v112 = vld [vmem:[#allocation2 + $0xbc] sm:$0xf]
    %v113 = vpack.c.bf16 %v80, %v80
    %v146 = vunpack.c.l.b16 %v81
    %v147 = vunpack.c.h.b16 %v81
    %v148 = vunpack.c.l.b16 %v82
    %v149 = vunpack.c.l.b16 %v83
    %v150 = vunpack.c.h.b16 %v83
    %v151 = vunpack.c.l.b16 %v84
    %v152 = vunpack.c.l.b16 %v85
    %v153 = vunpack.c.h.b16 %v85
    %v154 = vunpack.c.l.b16 %v86
    %v155 = vunpack.c.l.b16 %v87
    %v156 = vunpack.c.h.b16 %v87
    %v157 = vunpack.c.l.b16 %v88
    %v158 = vunpack.c.l.b16 %v89
    %v159 = vunpack.c.h.b16 %v89
    %v160 = vunpack.c.l.b16 %v90
    %v161 = vunpack.c.l.b16 %v91
    %v162 = vunpack.c.h.b16 %v91
    %v163 = vunpack.c.l.b16 %v92
    %v164 = vunpack.c.l.b16 %v93
    %v165 = vunpack.c.h.b16 %v93
    %v166 = vunpack.c.l.b16 %v94
    %v167 = vunpack.c.l.b16 %v95
    %v168 = vunpack.c.h.b16 %v95
    %v169 = vunpack.c.l.b16 %v96
    %v170 = vunpack.c.l.b16 %v97
    %v171 = vunpack.c.h.b16 %v97
    %v172 = vunpack.c.l.b16 %v98
    %v173 = vunpack.c.l.b16 %v99
    %v174 = vunpack.c.h.b16 %v99
    %v175 = vunpack.c.l.b16 %v100
    %v176 = vunpack.c.l.b16 %v101
    %v177 = vunpack.c.h.b16 %v101
    %v178 = vunpack.c.l.b16 %v102
    %v179 = vunpack.c.l.b16 %v103
    %v180 = vunpack.c.h.b16 %v103
    %v181 = vunpack.c.l.b16 %v104
    %v182 = vunpack.c.l.b16 %v105
    %v183 = vunpack.c.h.b16 %v105
    %v184 = vunpack.c.l.b16 %v106
    %v185 = vunpack.c.l.b16 %v107
    %v186 = vunpack.c.h.b16 %v107
    %v187 = vunpack.c.l.b16 %v108
    %v188 = vunpack.c.l.b16 %v109
    %v189 = vunpack.c.h.b16 %v109
    %v190 = vunpack.c.l.b16 %v110
    %v191 = vunpack.c.l.b16 %v111
    %v192 = vunpack.c.h.b16 %v111
    %v193 = vunpack.c.l.b16 %v112
    %v194 = vpack.c.b16 %v149, %v146
    %v195 = vpack.c.b16 %v150, %v147
    %v196 = vpack.c.b16 %v151, %v148
    %v197 = vpack.c.b16 %v155, %v152
    %v198 = vpack.c.b16 %v156, %v153
    %v199 = vpack.c.b16 %v157, %v154
    %v200 = vpack.c.b16 %v161, %v158
    %v201 = vpack.c.b16 %v162, %v159
    %v202 = vpack.c.b16 %v163, %v160
    %v203 = vpack.c.b16 %v167, %v164
    %v204 = vpack.c.b16 %v168, %v165
    %v205 = vpack.c.b16 %v169, %v166
    %v206 = vpack.c.b16 %v173, %v170
    %v207 = vpack.c.b16 %v174, %v171
    %v208 = vpack.c.b16 %v175, %v172
    %v209 = vpack.c.b16 %v179, %v176
    %v210 = vpack.c.b16 %v180, %v177
    %v211 = vpack.c.b16 %v181, %v178
    %v212 = vpack.c.b16 %v185, %v182
    %v213 = vpack.c.b16 %v186, %v183
    %v214 = vpack.c.b16 %v187, %v184
    %v215 = vpack.c.b16 %v191, %v188
    %v216 = vpack.c.b16 %v192, %v189
    %v217 = vpack.c.b16 %v193, %v190
    %242 = vmatprep.subr.bf16.mxu0 %v216
    %243 = vmatpush1.bf16.msra.mxu0 %v215
    %244 = vmatprep.subr.bf16.mxu0 %v213
    %245 = vmatpush1.bf16.msra.mxu0 %v212
    %246 = vmatprep.subr.bf16.mxu0 %v210
    %247 = vmatpush1.bf16.msra.mxu0 %v209
    %248 = vmatprep.subr.bf16.mxu0 %v207
    %249 = vmatpush1.bf16.msra.mxu0 %v206
    %250 = vmatprep.subr.bf16.mxu0 %v204
    %251 = vmatpush1.bf16.msra.mxu0 %v203
    %252 = vmatprep.subr.bf16.mxu0 %v201
    %253 = vmatpush1.bf16.msra.mxu0 %v200
    %254 = vmatprep.subr.bf16.mxu0 %v198
    %255 = vmatpush1.bf16.msra.mxu0 %v197
    %256 = vmatprep.subr.bf16.mxu0 %v195
    %257 = vmatpush1.bf16.msra.mxu0 %v194
    %258 = vmatprep.subr.bf16.mxu0 0
    %259 = vmatpush2.bf16.msra.mxu0 0
    %260 = vmatprep.subr.bf16.mxu0 0
    %261 = vmatpush2.bf16.msra.mxu0 0
    %262 = vmatprep.subr.bf16.mxu0 0
    %263 = vmatpush2.bf16.msra.mxu0 0
    %264 = vmatprep.subr.bf16.mxu0 0
    %265 = vmatpush2.bf16.msra.mxu0 0
    %266 = vmatprep.subr.bf16.mxu0 0
    %267 = vmatpush2.bf16.msra.mxu0 0
    %268 = vmatprep.subr.bf16.mxu0 0
    %269 = vmatpush2.bf16.msra.mxu0 0
    %270 = vmatprep.subr.bf16.mxu0 0
    %271 = vmatpush2.bf16.msra.mxu0 0
    %272 = vmatprep.subr.bf16.mxu0 0
    %273 = vmatpush2.bf16.msra.mxu0 0
    %274 = vmatprep.mubr.bf16.mxu0 0
    %275 = vmatmul.mubr.bf16.gmra.mxu0 %v113
    %v276 = vpop.f32.mrf.mxu0
    %v277 = vadd.f32 0.0, %v276
    %v278 = vpop.f32.mrf.mxu0
    %v279 = vadd.f32 0.0, %v278
    %v280 = vpop.f32.mrf.mxu0
    %v281 = vpop.f32.mrf.mxu0
    %282 = vdwg.mxu0
    %283 = vmatprep.subr.bf16.mxu0 0
    %284 = vmatpush1.bf16.msra.mxu0 %v217
    %285 = vmatprep.subr.bf16.mxu0 0
    %286 = vmatpush1.bf16.msra.mxu0 %v214
    %287 = vmatprep.subr.bf16.mxu0 0
    %288 = vmatpush1.bf16.msra.mxu0 %v211
    %289 = vmatprep.subr.bf16.mxu0 0
    %290 = vmatpush1.bf16.msra.mxu0 %v208
    %291 = vmatprep.subr.bf16.mxu0 0
    %292 = vmatpush1.bf16.msra.mxu0 %v205
    %293 = vmatprep.subr.bf16.mxu0 0
    %294 = vmatpush1.bf16.msra.mxu0 %v202
    %295 = vmatprep.subr.bf16.mxu0 0
    %296 = vmatpush1.bf16.msra.mxu0 %v199
    %297 = vmatprep.subr.bf16.mxu0 0
    %298 = vmatpush1.bf16.msra.mxu0 %v196
    %299 = vmatprep.subr.bf16.mxu0 0
    %300 = vmatpush2.bf16.msra.mxu0 0
    %301 = vmatprep.subr.bf16.mxu0 0
    %302 = vmatpush2.bf16.msra.mxu0 0
    %303 = vmatprep.subr.bf16.mxu0 0
    %304 = vmatpush2.bf16.msra.mxu0 0
    %305 = vmatprep.subr.bf16.mxu0 0
    %306 = vmatpush2.bf16.msra.mxu0 0
    %307 = vmatprep.subr.bf16.mxu0 0
    %308 = vmatpush2.bf16.msra.mxu0 0
    %309 = vmatprep.subr.bf16.mxu0 0
    %310 = vmatpush2.bf16.msra.mxu0 0
    %311 = vmatprep.subr.bf16.mxu0 0
    %312 = vmatpush2.bf16.msra.mxu0 0
    %313 = vmatprep.subr.bf16.mxu0 0
    %314 = vmatpush2.bf16.msra.mxu0 0
    %315 = vmatprep.mubr.bf16.mxu0 0
    %316 = vmatmul.mubr.bf16.gmra.mxu0 %v113
    %v317 = vpop.f32.mrf.mxu0
    %v318 = vadd.f32 0.0, %v317
    %v319 = vpop.f32.mrf.mxu0
    %v320 = vpop.f32.mrf.mxu0
    %v321 = vpop.f32.mrf.mxu0
    %322 = vdwg.mxu0
    %v323 = vld [vmem:[%s1] ss:$8 sm:$0x7]
    %s324 = scalar_lea.vmem %s1, 1
    %v325 = vld [vmem:[%s324] ss:$8 sm:$0x7]
    %v326 = vrot.slane %v277, 4
    %v327 = vadd.f32 %v277, %v326
    %v328 = vrot.slane %v327, 2
    %v329 = vadd.f32 %v327, %v328
    %v330 = vrot.slane %v329, 1
    %v331 = vadd.f32 %v329, %v330
    %v332 = vrot.slane %v279, 4
    %v333 = vadd.f32 %v279, %v332
    %v334 = vrot.slane %v333, 2
    %v335 = vadd.f32 %v333, %v334
    %v336 = vrot.slane %v335, 1
    %v337 = vadd.f32 %v335, %v336
    %v338 = vrot.slane %v318, 4
    %v339 = vadd.f32 %v318, %v338
    %v340 = vrot.slane %v339, 2
    %v341 = vadd.f32 %v339, %v340
    %v342 = vrot.slane %v341, 1
    %v343 = vadd.f32 %v341, %v342
    %v344 = vmul.f32 %v277, %v277
    %v345 = vmul.f32 %v279, %v279
    %v346 = vmul.f32 %v318, %v318
    %v347 = vrot.slane %v344, 4
    %v348 = vadd.f32 %v344, %v347
    %v349 = vrot.slane %v348, 2
    %v350 = vadd.f32 %v348, %v349
    %v351 = vrot.slane %v350, 1
    %v352 = vadd.f32 %v350, %v351
    %v353 = vrot.slane %v345, 4
    %v354 = vadd.f32 %v345, %v353
    %v355 = vrot.slane %v354, 2
    %v356 = vadd.f32 %v354, %v355
    %v357 = vrot.slane %v356, 1
    %v358 = vadd.f32 %v356, %v357
    %v359 = vrot.slane %v346, 4
    %v360 = vadd.f32 %v346, %v359
    %v361 = vrot.slane %v360, 2
    %v362 = vadd.f32 %v360, %v361
    %v363 = vrot.slane %v362, 1
    %v364 = vadd.f32 %v362, %v363
    %v365 = vmul.f32 %v331, 0.125
    %v366 = vmul.f32 %v337, 0.125
    %v367 = vmul.f32 %v343, 0.125
    %v368 = vmul.f32 %v352, 0.125
    %v369 = vmul.f32 %v358, 0.125
    %v370 = vmul.f32 %v364, 0.125
    %v371 = vmul.f32 %v365, %v365
    %v372 = vmul.f32 %v366, %v366
    %v373 = vmul.f32 %v367, %v367
    %v374 = vsub.f32 %v368, %v371
    %v375 = vsub.f32 %v369, %v372
    %v376 = vsub.f32 %v370, %v373
    %v377 = vmax.f32 %v374, 0.0
    %v378 = vmax.f32 %v375, 0.0
    %v379 = vmax.f32 %v376, 0.0
    %v380 = vadd.f32 %v377, 1e-05
    %v381 = vadd.f32 %v378, 1e-05
    %v382 = vadd.f32 %v379, 1e-05
    %v383 = vrsqrt.pop %v380
    %v384 = vrsqrt.pop %v381
    %v385 = vrsqrt.pop %v382
    %v389 = vcombine.low %v383, %v384
    %v391 = vunpack.c.l.s4 1966171168
    %v392 = vunpack.c.0.s8 %v391
    %v393 = vlaneseq
    %v394 = vshrl.u32 %v393, 7
    %v395 = vsub.s32 %v392, %v394
    %v396 = vrot.slane %v389, %v395
    %v398 = vunpack.c.l.s4 1966171168
    %v399 = vunpack.c.0.s8 %v398
    %v400 = vlaneseq
    %v401 = vshrl.u32 %v400, 7
    %v402 = vsub.s32 %v399, %v401
    %v403 = vrot.slane %v385, %v402
    %v404 = vcombine.low %v396, %v403
    %v406 = vunpack.c.l.s4 1966171168
    %v407 = vunpack.c.0.s8 %v406
    %v408 = vlaneseq
    %v409 = vshrl.u32 %v408, 7
    %v410 = vsub.s32 %v407, %v409
    %v411 = vrot.slane %v404, %v410
    %v413 = vmul.f32 %v323, %v411
    %v415 = vlaneseq
    %v416 = vshrl.u32 %v415, 7
    %v417 = vsub.s32 0, %v416
    %v418 = vrot.slane %v413, %v417
    %v419 = vlaneseq
    %v420 = vshrl.u32 %v419, 7
    %v421 = vsub.s32 1, %v420
    %v422 = vrot.slane %v413, %v421
    %v423 = vlaneseq
    %v424 = vshrl.u32 %v423, 7
    %v425 = vsub.s32 2, %v424
    %v426 = vrot.slane %v413, %v425
    %v430 = vmul.f32 %v365, %v418
    %v431 = vmul.f32 %v366, %v422
    %v432 = vmul.f32 %v367, %v426
    %v436 = vcombine.low %v430, %v431
    %v438 = vunpack.c.l.s4 1966171168
    %v439 = vunpack.c.0.s8 %v438
    %v440 = vlaneseq
    %v441 = vshrl.u32 %v440, 7
    %v442 = vsub.s32 %v439, %v441
    %v443 = vrot.slane %v436, %v442
    %v445 = vunpack.c.l.s4 1966171168
    %v446 = vunpack.c.0.s8 %v445
    %v447 = vlaneseq
    %v448 = vshrl.u32 %v447, 7
    %v449 = vsub.s32 %v446, %v448
    %v450 = vrot.slane %v432, %v449
    %v451 = vcombine.low %v443, %v450
    %v453 = vunpack.c.l.s4 1966171168
    %v454 = vunpack.c.0.s8 %v453
    %v455 = vlaneseq
    %v456 = vshrl.u32 %v455, 7
    %v457 = vsub.s32 %v454, %v456
    %v458 = vrot.slane %v451, %v457
    %v460 = vsub.f32 %v325, %v458
    %v461 = vmul.f32 %v277, %v418
    %v462 = vmul.f32 %v279, %v422
    %v463 = vmul.f32 %v318, %v426
    %v465 = vlaneseq
    %v466 = vshrl.u32 %v465, 7
    %v467 = vsub.s32 0, %v466
    %v468 = vrot.slane %v460, %v467
    %v469 = vlaneseq
    %v470 = vshrl.u32 %v469, 7
    %v471 = vsub.s32 1, %v470
    %v472 = vrot.slane %v460, %v471
    %v473 = vlaneseq
    %v474 = vshrl.u32 %v473, 7
    %v475 = vsub.s32 2, %v474
    %v476 = vrot.slane %v460, %v475
    %v480 = vadd.f32 %v461, %v468
    %v481 = vadd.f32 %v462, %v472
    %v482 = vadd.f32 %v463, %v476
    %v483 = vmax.f32 %v480, 0.0
    %v484 = vmax.f32 %v481, 0.0
    %v485 = vmax.f32 %v482, 0.0
    %v486 = vld [vmem:[#allocation5] sm:$0xff]
    %v487 = vld [vmem:[#allocation5 + $0x8] sm:$0xff]
    %v488 = vld [vmem:[#allocation5 + $0x10] sm:$0xff]
    %v489 = vld [vmem:[#allocation5 + $0x18] sm:$0xff]
    %v490 = vld [vmem:[#allocation5 + $0x20] sm:$0xff]
    %v491 = vld [vmem:[#allocation5 + $0x28] sm:$0xff]
    %v492 = vld [vmem:[#allocation5 + $0x30] sm:$0xff]
    %v493 = vld [vmem:[#allocation5 + $0x38] sm:$0xff]
    %v494 = vld [vmem:[#allocation5 + $0x40] sm:$0xff]
    %v495 = vld [vmem:[#allocation5 + $0x48] sm:$0xff]
    %v496 = vld [vmem:[#allocation5 + $0x50] sm:$0xff]
    %v497 = vld [vmem:[#allocation5 + $0x58] sm:$0xff]
    %v498 = vld [vmem:[#allocation5 + $0x60] sm:$0xff]
    %v499 = vld [vmem:[#allocation5 + $0x68] sm:$0xff]
    %v500 = vld [vmem:[#allocation5 + $0x70] sm:$0xff]
    %v501 = vld [vmem:[#allocation5 + $0x78] sm:$0xff]
    %v502 = vld [vmem:[#allocation5 + $0x80] sm:$0xff]
    %v503 = vld [vmem:[#allocation5 + $0x88] sm:$0xff]
    %v504 = vld [vmem:[#allocation5 + $0x90] sm:$0xff]
    %v505 = vld [vmem:[#allocation5 + $0x98] sm:$0xff]
    %v506 = vld [vmem:[#allocation5 + $0xa0] sm:$0xff]
    %v507 = vld [vmem:[#allocation5 + $0xa8] sm:$0xff]
    %v508 = vld [vmem:[#allocation5 + $0xb0] sm:$0xff]
    %v509 = vld [vmem:[#allocation5 + $0xb8] sm:$0xff]
    %v510 = vld [vmem:[#allocation5 + $0xc0] sm:$0xff]
    %v511 = vld [vmem:[#allocation5 + $0xc8] sm:$0xff]
    %v512 = vld [vmem:[#allocation5 + $0xd0] sm:$0xff]
    %v513 = vld [vmem:[#allocation5 + $0xd8] sm:$0xff]
    %v514 = vld [vmem:[#allocation5 + $0xe0] sm:$0xff]
    %v515 = vld [vmem:[#allocation5 + $0xe8] sm:$0xff]
    %v516 = vld [vmem:[#allocation5 + $0xf0] sm:$0xff]
    %v517 = vld [vmem:[#allocation5 + $0xf8] sm:$0xff]
    %v518 = vld [vmem:[#allocation5 + $0x100] sm:$0xff]
    %v519 = vld [vmem:[#allocation5 + $0x108] sm:$0xff]
    %v520 = vld [vmem:[#allocation5 + $0x110] sm:$0xff]
    %v521 = vld [vmem:[#allocation5 + $0x118] sm:$0xff]
    %v522 = vld [vmem:[#allocation5 + $0x120] sm:$0xff]
    %v523 = vld [vmem:[#allocation5 + $0x128] sm:$0xff]
    %v524 = vld [vmem:[#allocation5 + $0x130] sm:$0xff]
    %v525 = vld [vmem:[#allocation5 + $0x138] sm:$0xff]
    %v526 = vld [vmem:[#allocation5 + $0x140] sm:$0xff]
    %v527 = vld [vmem:[#allocation5 + $0x148] sm:$0xff]
    %v528 = vld [vmem:[#allocation5 + $0x150] sm:$0xff]
    %v529 = vld [vmem:[#allocation5 + $0x158] sm:$0xff]
    %v530 = vld [vmem:[#allocation5 + $0x160] sm:$0xff]
    %v531 = vld [vmem:[#allocation5 + $0x168] sm:$0xff]
    %v532 = vld [vmem:[#allocation5 + $0x170] sm:$0xff]
    %v533 = vld [vmem:[#allocation5 + $0x178] sm:$0xff]
    %v534 = vpack.c.bf16 %v483, %v483
    %v535 = vpack.c.bf16 %v484, %v484
    %v536 = vpack.c.bf16 %v485, %v485
    %v585 = vunpack.c.l.b16 %v486
    %v586 = vunpack.c.h.b16 %v486
    %v587 = vunpack.c.l.b16 %v487
    %v588 = vunpack.c.h.b16 %v487
    %v589 = vunpack.c.l.b16 %v488
    %v590 = vunpack.c.h.b16 %v488
    %v591 = vunpack.c.l.b16 %v489
    %v592 = vunpack.c.h.b16 %v489
    %v593 = vunpack.c.l.b16 %v490
    %v594 = vunpack.c.h.b16 %v490
    %v595 = vunpack.c.l.b16 %v491
    %v596 = vunpack.c.h.b16 %v491
    %v597 = vunpack.c.l.b16 %v492
    %v598 = vunpack.c.h.b16 %v492
    %v599 = vunpack.c.l.b16 %v493
    %v600 = vunpack.c.h.b16 %v493
    %v601 = vunpack.c.l.b16 %v494
    %v602 = vunpack.c.h.b16 %v494
    %v603 = vunpack.c.l.b16 %v495
    %v604 = vunpack.c.h.b16 %v495
    %v605 = vunpack.c.l.b16 %v496
    %v606 = vunpack.c.h.b16 %v496
    %v607 = vunpack.c.l.b16 %v497
    %v608 = vunpack.c.h.b16 %v497
    %v609 = vunpack.c.l.b16 %v498
    %v610 = vunpack.c.h.b16 %v498
    %v611 = vunpack.c.l.b16 %v499
    %v612 = vunpack.c.h.b16 %v499
    %v613 = vunpack.c.l.b16 %v500
    %v614 = vunpack.c.h.b16 %v500
    %v615 = vunpack.c.l.b16 %v501
    %v616 = vunpack.c.h.b16 %v501
    %v617 = vunpack.c.l.b16 %v502
    %v618 = vunpack.c.h.b16 %v502
    %v619 = vunpack.c.l.b16 %v503
    %v620 = vunpack.c.h.b16 %v503
    %v621 = vunpack.c.l.b16 %v504
    %v622 = vunpack.c.h.b16 %v504
    %v623 = vunpack.c.l.b16 %v505
    %v624 = vunpack.c.h.b16 %v505
    %v625 = vunpack.c.l.b16 %v506
    %v626 = vunpack.c.h.b16 %v506
    %v627 = vunpack.c.l.b16 %v507
    %v628 = vunpack.c.h.b16 %v507
    %v629 = vunpack.c.l.b16 %v508
    %v630 = vunpack.c.h.b16 %v508
    %v631 = vunpack.c.l.b16 %v509
    %v632 = vunpack.c.h.b16 %v509
    %v633 = vunpack.c.l.b16 %v510
    %v634 = vunpack.c.h.b16 %v510
    %v635 = vunpack.c.l.b16 %v511
    %v636 = vunpack.c.h.b16 %v511
    %v637 = vunpack.c.l.b16 %v512
    %v638 = vunpack.c.h.b16 %v512
    %v639 = vunpack.c.l.b16 %v513
    %v640 = vunpack.c.h.b16 %v513
    %v641 = vunpack.c.l.b16 %v514
    %v642 = vunpack.c.h.b16 %v514
    %v643 = vunpack.c.l.b16 %v515
    %v644 = vunpack.c.h.b16 %v515
    %v645 = vunpack.c.l.b16 %v516
    %v646 = vunpack.c.h.b16 %v516
    %v647 = vunpack.c.l.b16 %v517
    %v648 = vunpack.c.h.b16 %v517
    %v649 = vunpack.c.l.b16 %v518
    %v650 = vunpack.c.h.b16 %v518
    %v651 = vunpack.c.l.b16 %v519
    %v652 = vunpack.c.h.b16 %v519
    %v653 = vunpack.c.l.b16 %v520
    %v654 = vunpack.c.h.b16 %v520
    %v655 = vunpack.c.l.b16 %v521
    %v656 = vunpack.c.h.b16 %v521
    %v657 = vunpack.c.l.b16 %v522
    %v658 = vunpack.c.h.b16 %v522
    %v659 = vunpack.c.l.b16 %v523
    %v660 = vunpack.c.h.b16 %v523
    %v661 = vunpack.c.l.b16 %v524
    %v662 = vunpack.c.h.b16 %v524
    %v663 = vunpack.c.l.b16 %v525
    %v664 = vunpack.c.h.b16 %v525
    %v665 = vunpack.c.l.b16 %v526
    %v666 = vunpack.c.h.b16 %v526
    %v667 = vunpack.c.l.b16 %v527
    %v668 = vunpack.c.h.b16 %v527
    %v669 = vunpack.c.l.b16 %v528
    %v670 = vunpack.c.h.b16 %v528
    %v671 = vunpack.c.l.b16 %v529
    %v672 = vunpack.c.h.b16 %v529
    %v673 = vunpack.c.l.b16 %v530
    %v674 = vunpack.c.h.b16 %v530
    %v675 = vunpack.c.l.b16 %v531
    %v676 = vunpack.c.h.b16 %v531
    %v677 = vunpack.c.l.b16 %v532
    %v678 = vunpack.c.h.b16 %v532
    %v679 = vunpack.c.l.b16 %v533
    %v680 = vunpack.c.h.b16 %v533
    %v681 = vpack.c.b16 %v587, %v585
    %v682 = vpack.c.b16 %v588, %v586
    %v683 = vpack.c.b16 %v591, %v589
    %v684 = vpack.c.b16 %v592, %v590
    %v685 = vpack.c.b16 %v595, %v593
    %v686 = vpack.c.b16 %v596, %v594
    %v687 = vpack.c.b16 %v599, %v597
    %v688 = vpack.c.b16 %v600, %v598
    %v689 = vpack.c.b16 %v603, %v601
    %v690 = vpack.c.b16 %v604, %v602
    %v691 = vpack.c.b16 %v607, %v605
    %v692 = vpack.c.b16 %v608, %v606
    %v693 = vpack.c.b16 %v611, %v609
    %v694 = vpack.c.b16 %v612, %v610
    %v695 = vpack.c.b16 %v615, %v613
    %v696 = vpack.c.b16 %v616, %v614
    %v697 = vpack.c.b16 %v619, %v617
    %v698 = vpack.c.b16 %v620, %v618
    %v699 = vpack.c.b16 %v623, %v621
    %v700 = vpack.c.b16 %v624, %v622
    %v701 = vpack.c.b16 %v627, %v625
    %v702 = vpack.c.b16 %v628, %v626
    %v703 = vpack.c.b16 %v631, %v629
    %v704 = vpack.c.b16 %v632, %v630
    %v705 = vpack.c.b16 %v635, %v633
    %v706 = vpack.c.b16 %v636, %v634
    %v707 = vpack.c.b16 %v639, %v637
    %v708 = vpack.c.b16 %v640, %v638
    %v709 = vpack.c.b16 %v643, %v641
    %v710 = vpack.c.b16 %v644, %v642
    %v711 = vpack.c.b16 %v647, %v645
    %v712 = vpack.c.b16 %v648, %v646
    %v713 = vpack.c.b16 %v651, %v649
    %v714 = vpack.c.b16 %v652, %v650
    %v715 = vpack.c.b16 %v655, %v653
    %v716 = vpack.c.b16 %v656, %v654
    %v717 = vpack.c.b16 %v659, %v657
    %v718 = vpack.c.b16 %v660, %v658
    %v719 = vpack.c.b16 %v663, %v661
    %v720 = vpack.c.b16 %v664, %v662
    %v721 = vpack.c.b16 %v667, %v665
    %v722 = vpack.c.b16 %v668, %v666
    %v723 = vpack.c.b16 %v671, %v669
    %v724 = vpack.c.b16 %v672, %v670
    %v725 = vpack.c.b16 %v675, %v673
    %v726 = vpack.c.b16 %v676, %v674
    %v727 = vpack.c.b16 %v679, %v677
    %v728 = vpack.c.b16 %v680, %v678
    %777 = vmatprep.subr.bf16.mxu0 %v696
    %778 = vmatpush1.bf16.msra.mxu0 %v695
    %779 = vmatprep.subr.bf16.mxu0 %v694
    %780 = vmatpush1.bf16.msra.mxu0 %v693
    %781 = vmatprep.subr.bf16.mxu0 %v692
    %782 = vmatpush1.bf16.msra.mxu0 %v691
    %783 = vmatprep.subr.bf16.mxu0 %v690
    %784 = vmatpush1.bf16.msra.mxu0 %v689
    %785 = vmatprep.subr.bf16.mxu0 %v688
    %786 = vmatpush1.bf16.msra.mxu0 %v687
    %787 = vmatprep.subr.bf16.mxu0 %v686
    %788 = vmatpush1.bf16.msra.mxu0 %v685
    %789 = vmatprep.subr.bf16.mxu0 %v684
    %790 = vmatpush1.bf16.msra.mxu0 %v683
    %791 = vmatprep.subr.bf16.mxu0 %v682
    %792 = vmatpush1.bf16.msra.mxu0 %v681
    %793 = vmatprep.subr.bf16.mxu0 %v712
    %794 = vmatpush2.bf16.msra.mxu0 %v711
    %795 = vmatprep.subr.bf16.mxu0 %v710
    %796 = vmatpush2.bf16.msra.mxu0 %v709
    %797 = vmatprep.subr.bf16.mxu0 %v708
    %798 = vmatpush2.bf16.msra.mxu0 %v707
    %799 = vmatprep.subr.bf16.mxu0 %v706
    %800 = vmatpush2.bf16.msra.mxu0 %v705
    %801 = vmatprep.subr.bf16.mxu0 %v704
    %802 = vmatpush2.bf16.msra.mxu0 %v703
    %803 = vmatprep.subr.bf16.mxu0 %v702
    %804 = vmatpush2.bf16.msra.mxu0 %v701
    %805 = vmatprep.subr.bf16.mxu0 %v700
    %806 = vmatpush2.bf16.msra.mxu0 %v699
    %807 = vmatprep.subr.bf16.mxu0 %v698
    %808 = vmatpush2.bf16.msra.mxu0 %v697
    %809 = vmatprep.mubr.bf16.mxu0 %v535
    %810 = vmatmul.mubr.bf16.gmra.mxu0 %v534
    %v811 = vpop.f32.mrf.mxu0
    %v812 = vadd.f32 0.0, %v811
    %v813 = vpop.f32.mrf.mxu0
    %v814 = vadd.f32 0.0, %v813
    %v815 = vpop.f32.mrf.mxu0
    %v816 = vpop.f32.mrf.mxu0
    %817 = vdwg.mxu0
    %818 = vmatprep.subr.bf16.mxu0 %v728
    %819 = vmatpush1.bf16.msra.mxu0 %v727
    %820 = vmatprep.subr.bf16.mxu0 %v726
    %821 = vmatpush1.bf16.msra.mxu0 %v725
    %822 = vmatprep.subr.bf16.mxu0 %v724
    %823 = vmatpush1.bf16.msra.mxu0 %v723
    %824 = vmatprep.subr.bf16.mxu0 %v722
    %825 = vmatpush1.bf16.msra.mxu0 %v721
    %826 = vmatprep.subr.bf16.mxu0 %v720
    %827 = vmatpush1.bf16.msra.mxu0 %v719
    %828 = vmatprep.subr.bf16.mxu0 %v718
    %829 = vmatpush1.bf16.msra.mxu0 %v717
    %830 = vmatprep.subr.bf16.mxu0 %v716
    %831 = vmatpush1.bf16.msra.mxu0 %v715
    %832 = vmatprep.subr.bf16.mxu0 %v714
    %833 = vmatpush1.bf16.msra.mxu0 %v713
    %834 = vmatprep.subr.bf16.mxu0 0
    %835 = vmatpush2.bf16.msra.mxu0 0
    %836 = vmatprep.subr.bf16.mxu0 0
    %837 = vmatpush2.bf16.msra.mxu0 0
    %838 = vmatprep.subr.bf16.mxu0 0
    %839 = vmatpush2.bf16.msra.mxu0 0
    %840 = vmatprep.subr.bf16.mxu0 0
    %841 = vmatpush2.bf16.msra.mxu0 0
    %842 = vmatprep.subr.bf16.mxu0 0
    %843 = vmatpush2.bf16.msra.mxu0 0
    %844 = vmatprep.subr.bf16.mxu0 0
    %845 = vmatpush2.bf16.msra.mxu0 0
    %846 = vmatprep.subr.bf16.mxu0 0
    %847 = vmatpush2.bf16.msra.mxu0 0
    %848 = vmatprep.subr.bf16.mxu0 0
    %849 = vmatpush2.bf16.msra.mxu0 0
    %850 = vmatprep.mubr.bf16.mxu0 0
    %851 = vmatmul.mubr.bf16.gmra.mxu0 %v536
    %v852 = vpop.f32.mrf.mxu0
    %v853 = vadd.f32 %v812, %v852
    %v854 = vpop.f32.mrf.mxu0
    %v855 = vadd.f32 %v814, %v854
    %v856 = vpop.f32.mrf.mxu0
    %v857 = vpop.f32.mrf.mxu0
    %858 = vdwg.mxu0
    %s859 = scalar_lea.vmem %s1, 2
    %v860 = vld [vmem:[%s859] ss:$8 sm:$0x3]
    %s861 = scalar_lea.vmem %s1, 3
    %v862 = vld [vmem:[%s861] ss:$8 sm:$0x3]
    %v863 = vrot.slane %v853, 4
    %v864 = vadd.f32 %v853, %v863
    %v865 = vrot.slane %v864, 2
    %v866 = vadd.f32 %v864, %v865
    %v867 = vrot.slane %v866, 1
    %v868 = vadd.f32 %v866, %v867
    %v869 = vrot.slane %v855, 4
    %v870 = vadd.f32 %v855, %v869
    %v871 = vrot.slane %v870, 2
    %v872 = vadd.f32 %v870, %v871
    %v873 = vrot.slane %v872, 1
    %v874 = vadd.f32 %v872, %v873
    %v875 = vmul.f32 %v853, %v853
    %v876 = vmul.f32 %v855, %v855
    %v877 = vrot.slane %v875, 4
    %v878 = vadd.f32 %v875, %v877
    %v879 = vrot.slane %v878, 2
    %v880 = vadd.f32 %v878, %v879
    %v881 = vrot.slane %v880, 1
    %v882 = vadd.f32 %v880, %v881
    %v883 = vrot.slane %v876, 4
    %v884 = vadd.f32 %v876, %v883
    %v885 = vrot.slane %v884, 2
    %v886 = vadd.f32 %v884, %v885
    %v887 = vrot.slane %v886, 1
    %v888 = vadd.f32 %v886, %v887
    %v889 = vmul.f32 %v868, 0.125
    %v890 = vmul.f32 %v874, 0.125
    %v891 = vmul.f32 %v882, 0.125
    %v892 = vmul.f32 %v888, 0.125
    %v893 = vmul.f32 %v889, %v889
    %v894 = vmul.f32 %v890, %v890
    %v895 = vsub.f32 %v891, %v893
    %v896 = vsub.f32 %v892, %v894
    %v897 = vmax.f32 %v895, 0.0
    %v898 = vmax.f32 %v896, 0.0
    %v899 = vadd.f32 %v897, 1e-05
    %v900 = vadd.f32 %v898, 1e-05
    %v901 = vrsqrt.pop %v899
    %v902 = vrsqrt.pop %v900
    %v905 = vcombine.low %v901, %v902
    %v907 = vunpack.c.l.s4 1966171168
    %v908 = vunpack.c.0.s8 %v907
    %v909 = vlaneseq
    %v910 = vshrl.u32 %v909, 7
    %v911 = vsub.s32 %v908, %v910
    %v912 = vrot.slane %v905, %v911
    %v914 = vunpack.c.l.s4 1966171168
    %v915 = vunpack.c.0.s8 %v914
    %v916 = vlaneseq
    %v917 = vshrl.u32 %v916, 7
    %v918 = vsub.s32 %v915, %v917
    %v919 = vrot.slane %v912, %v918
    %v921 = vmul.f32 %v860, %v919
    %v923 = vlaneseq
    %v924 = vshrl.u32 %v923, 7
    %v925 = vsub.s32 0, %v924
    %v926 = vrot.slane %v921, %v925
    %v927 = vlaneseq
    %v928 = vshrl.u32 %v927, 7
    %v929 = vsub.s32 1, %v928
    %v930 = vrot.slane %v921, %v929
    %v933 = vmul.f32 %v889, %v926
    %v934 = vmul.f32 %v890, %v930
    %v937 = vcombine.low %v933, %v934
    %v939 = vunpack.c.l.s4 1966171168
    %v940 = vunpack.c.0.s8 %v939
    %v941 = vlaneseq
    %v942 = vshrl.u32 %v941, 7
    %v943 = vsub.s32 %v940, %v942
    %v944 = vrot.slane %v937, %v943
    %v946 = vunpack.c.l.s4 1966171168
    %v947 = vunpack.c.0.s8 %v946
    %v948 = vlaneseq
    %v949 = vshrl.u32 %v948, 7
    %v950 = vsub.s32 %v947, %v949
    %v951 = vrot.slane %v944, %v950
    %v953 = vsub.f32 %v862, %v951
    %v954 = vmul.f32 %v853, %v926
    %v955 = vmul.f32 %v855, %v930
    %v957 = vlaneseq
    %v958 = vshrl.u32 %v957, 7
    %v959 = vsub.s32 0, %v958
    %v960 = vrot.slane %v953, %v959
    %v961 = vlaneseq
    %v962 = vshrl.u32 %v961, 7
    %v963 = vsub.s32 1, %v962
    %v964 = vrot.slane %v953, %v963
    %v967 = vadd.f32 %v954, %v960
    %v968 = vadd.f32 %v955, %v964
    %v969 = vmax.f32 %v967, 0.0
    %v970 = vmax.f32 %v968, 0.0
    %v971 = vld [vmem:[#allocation7] sm:$0xf]
    %v972 = vld [vmem:[#allocation7 + $0x4] sm:$0xf]
    %v973 = vld [vmem:[#allocation7 + $0x8] sm:$0xf]
    %v974 = vld [vmem:[#allocation7 + $0xc] sm:$0xf]
    %v975 = vld [vmem:[#allocation7 + $0x10] sm:$0xf]
    %v976 = vld [vmem:[#allocation7 + $0x14] sm:$0xf]
    %v977 = vld [vmem:[#allocation7 + $0x18] sm:$0xf]
    %v978 = vld [vmem:[#allocation7 + $0x1c] sm:$0xf]
    %v979 = vld [vmem:[#allocation7 + $0x20] sm:$0xf]
    %v980 = vld [vmem:[#allocation7 + $0x24] sm:$0xf]
    %v981 = vld [vmem:[#allocation7 + $0x28] sm:$0xf]
    %v982 = vld [vmem:[#allocation7 + $0x2c] sm:$0xf]
    %v983 = vld [vmem:[#allocation7 + $0x30] sm:$0xf]
    %v984 = vld [vmem:[#allocation7 + $0x34] sm:$0xf]
    %v985 = vld [vmem:[#allocation7 + $0x38] sm:$0xf]
    %v986 = vld [vmem:[#allocation7 + $0x3c] sm:$0xf]
    %v987 = vld [vmem:[#allocation7 + $0x40] sm:$0xf]
    %v988 = vld [vmem:[#allocation7 + $0x44] sm:$0xf]
    %v989 = vld [vmem:[#allocation7 + $0x48] sm:$0xf]
    %v990 = vld [vmem:[#allocation7 + $0x4c] sm:$0xf]
    %v991 = vld [vmem:[#allocation7 + $0x50] sm:$0xf]
    %v992 = vld [vmem:[#allocation7 + $0x54] sm:$0xf]
    %v993 = vld [vmem:[#allocation7 + $0x58] sm:$0xf]
    %v994 = vld [vmem:[#allocation7 + $0x5c] sm:$0xf]
    %v995 = vld [vmem:[#allocation7 + $0x60] sm:$0xf]
    %v996 = vld [vmem:[#allocation7 + $0x64] sm:$0xf]
    %v997 = vld [vmem:[#allocation7 + $0x68] sm:$0xf]
    %v998 = vld [vmem:[#allocation7 + $0x6c] sm:$0xf]
    %v999 = vld [vmem:[#allocation7 + $0x70] sm:$0xf]
    %v1000 = vld [vmem:[#allocation7 + $0x74] sm:$0xf]
    %v1001 = vld [vmem:[#allocation7 + $0x78] sm:$0xf]
    %v1002 = vld [vmem:[#allocation7 + $0x7c] sm:$0xf]
    %v1003 = vpack.c.bf16 %v969, %v969
    %v1004 = vpack.c.bf16 %v970, %v970
    %v1037 = vunpack.c.l.b16 %v971
    %v1038 = vunpack.c.l.b16 %v972
    %v1039 = vunpack.c.l.b16 %v973
    %v1040 = vunpack.c.l.b16 %v974
    %v1041 = vunpack.c.l.b16 %v975
    %v1042 = vunpack.c.l.b16 %v976
    %v1043 = vunpack.c.l.b16 %v977
    %v1044 = vunpack.c.l.b16 %v978
    %v1045 = vunpack.c.l.b16 %v979
    %v1046 = vunpack.c.l.b16 %v980
    %v1047 = vunpack.c.l.b16 %v981
    %v1048 = vunpack.c.l.b16 %v982
    %v1049 = vunpack.c.l.b16 %v983
    %v1050 = vunpack.c.l.b16 %v984
    %v1051 = vunpack.c.l.b16 %v985
    %v1052 = vunpack.c.l.b16 %v986
    %v1053 = vunpack.c.l.b16 %v987
    %v1054 = vunpack.c.l.b16 %v988
    %v1055 = vunpack.c.l.b16 %v989
    %v1056 = vunpack.c.l.b16 %v990
    %v1057 = vunpack.c.l.b16 %v991
    %v1058 = vunpack.c.l.b16 %v992
    %v1059 = vunpack.c.l.b16 %v993
    %v1060 = vunpack.c.l.b16 %v994
    %v1061 = vunpack.c.l.b16 %v995
    %v1062 = vunpack.c.l.b16 %v996
    %v1063 = vunpack.c.l.b16 %v997
    %v1064 = vunpack.c.l.b16 %v998
    %v1065 = vunpack.c.l.b16 %v999
    %v1066 = vunpack.c.l.b16 %v1000
    %v1067 = vunpack.c.l.b16 %v1001
    %v1068 = vunpack.c.l.b16 %v1002
    %v1069 = vpack.c.b16 %v1038, %v1037
    %v1070 = vpack.c.b16 %v1040, %v1039
    %v1071 = vpack.c.b16 %v1042, %v1041
    %v1072 = vpack.c.b16 %v1044, %v1043
    %v1073 = vpack.c.b16 %v1046, %v1045
    %v1074 = vpack.c.b16 %v1048, %v1047
    %v1075 = vpack.c.b16 %v1050, %v1049
    %v1076 = vpack.c.b16 %v1052, %v1051
    %v1077 = vpack.c.b16 %v1054, %v1053
    %v1078 = vpack.c.b16 %v1056, %v1055
    %v1079 = vpack.c.b16 %v1058, %v1057
    %v1080 = vpack.c.b16 %v1060, %v1059
    %v1081 = vpack.c.b16 %v1062, %v1061
    %v1082 = vpack.c.b16 %v1064, %v1063
    %v1083 = vpack.c.b16 %v1066, %v1065
    %v1084 = vpack.c.b16 %v1068, %v1067
    %1101 = vmatprep.subr.bf16.mxu0 0
    %1102 = vmatpush1.bf16.msra.mxu0 %v1076
    %1103 = vmatprep.subr.bf16.mxu0 0
    %1104 = vmatpush1.bf16.msra.mxu0 %v1075
    %1105 = vmatprep.subr.bf16.mxu0 0
    %1106 = vmatpush1.bf16.msra.mxu0 %v1074
    %1107 = vmatprep.subr.bf16.mxu0 0
    %1108 = vmatpush1.bf16.msra.mxu0 %v1073
    %1109 = vmatprep.subr.bf16.mxu0 0
    %1110 = vmatpush1.bf16.msra.mxu0 %v1072
    %1111 = vmatprep.subr.bf16.mxu0 0
    %1112 = vmatpush1.bf16.msra.mxu0 %v1071
    %1113 = vmatprep.subr.bf16.mxu0 0
    %1114 = vmatpush1.bf16.msra.mxu0 %v1070
    %1115 = vmatprep.subr.bf16.mxu0 0
    %1116 = vmatpush1.bf16.msra.mxu0 %v1069
    %1117 = vmatprep.subr.bf16.mxu0 0
    %1118 = vmatpush2.bf16.msra.mxu0 %v1084
    %1119 = vmatprep.subr.bf16.mxu0 0
    %1120 = vmatpush2.bf16.msra.mxu0 %v1083
    %1121 = vmatprep.subr.bf16.mxu0 0
    %1122 = vmatpush2.bf16.msra.mxu0 %v1082
    %1123 = vmatprep.subr.bf16.mxu0 0
    %1124 = vmatpush2.bf16.msra.mxu0 %v1081
    %1125 = vmatprep.subr.bf16.mxu0 0
    %1126 = vmatpush2.bf16.msra.mxu0 %v1080
    %1127 = vmatprep.subr.bf16.mxu0 0
    %1128 = vmatpush2.bf16.msra.mxu0 %v1079
    %1129 = vmatprep.subr.bf16.mxu0 0
    %1130 = vmatpush2.bf16.msra.mxu0 %v1078
    %1131 = vmatprep.subr.bf16.mxu0 0
    %1132 = vmatpush2.bf16.msra.mxu0 %v1077
    %1133 = vmatprep.mubr.bf16.mxu0 %v1004
    %1134 = vmatmul.mubr.bf16.gmra.mxu0 %v1003
    %v1135 = vpop.f32.mrf.mxu0
    %v1136 = vadd.f32 0.0, %v1135
    %v1137 = vpop.f32.mrf.mxu0
    %v1138 = vpop.f32.mrf.mxu0
    %v1139 = vpop.f32.mrf.mxu0
    %1140 = vdwg.mxu0
    %v1141 = vld [vmem:[%s1 + $0x4] ss:$0 sm:$0xff]
    %v1142 = vld [vmem:[%s1 + $0x5] ss:$0 sm:$0xff]
    %v1143 = vrot.slane %v1136, 4
    %v1144 = vadd.f32 %v1136, %v1143
    %v1145 = vrot.slane %v1144, 2
    %v1146 = vadd.f32 %v1144, %v1145
    %v1147 = vrot.slane %v1146, 1
    %v1148 = vadd.f32 %v1146, %v1147
    %v1149 = vmul.f32 %v1136, %v1136
    %v1150 = vrot.slane %v1149, 4
    %v1151 = vadd.f32 %v1149, %v1150
    %v1152 = vrot.slane %v1151, 2
    %v1153 = vadd.f32 %v1151, %v1152
    %v1154 = vrot.slane %v1153, 1
    %v1155 = vadd.f32 %v1153, %v1154
    %v1156 = vmul.f32 %v1148, 0.125
    %v1157 = vmul.f32 %v1155, 0.125
    %v1158 = vmul.f32 %v1156, %v1156
    %v1159 = vsub.f32 %v1157, %v1158
    %v1160 = vmax.f32 %v1159, 0.0
    %v1161 = vadd.f32 %v1160, 1e-05
    %v1162 = vrsqrt.pop %v1161
    %v1163 = vmul.f32 %v1141, %v1162
    %v1164 = vmul.f32 %v1156, %v1163
    %v1165 = vsub.f32 %v1142, %v1164
    %v1166 = vmul.f32 %v1136, %v1163
    %v1167 = vadd.f32 %v1166, %v1165
    %v1168 = vmax.f32 %v1167, 0.0
    %v1169 = vld [vmem:[#allocation8] sm:$0xf]
    %v1170 = vld [vmem:[#allocation8 + $0x4] sm:$0xf]
    %v1171 = vld [vmem:[#allocation8 + $0x8] sm:$0xf]
    %v1172 = vld [vmem:[#allocation8 + $0xc] sm:$0xf]
    %v1173 = vld [vmem:[#allocation8 + $0x10] sm:$0xf]
    %v1174 = vld [vmem:[#allocation8 + $0x14] sm:$0xf]
    %v1175 = vld [vmem:[#allocation8 + $0x18] sm:$0xf]
    %v1176 = vld [vmem:[#allocation8 + $0x1c] sm:$0xf]
    %v1177 = vld [vmem:[#allocation8 + $0x20] sm:$0xf]
    %v1178 = vld [vmem:[#allocation8 + $0x24] sm:$0xf]
    %v1179 = vld [vmem:[#allocation8 + $0x28] sm:$0xf]
    %v1180 = vld [vmem:[#allocation8 + $0x2c] sm:$0xf]
    %v1181 = vld [vmem:[#allocation8 + $0x30] sm:$0xf]
    %v1182 = vld [vmem:[#allocation8 + $0x34] sm:$0xf]
    %v1183 = vld [vmem:[#allocation8 + $0x38] sm:$0xf]
    %v1184 = vld [vmem:[#allocation8 + $0x3c] sm:$0xf]
    %v1185 = vpack.c.bf16 %v1168, %v1168
    %v1202 = vunpack.c.l.b16 %v1169
    %v1203 = vunpack.c.l.b16 %v1170
    %v1204 = vunpack.c.l.b16 %v1171
    %v1205 = vunpack.c.l.b16 %v1172
    %v1206 = vunpack.c.l.b16 %v1173
    %v1207 = vunpack.c.l.b16 %v1174
    %v1208 = vunpack.c.l.b16 %v1175
    %v1209 = vunpack.c.l.b16 %v1176
    %v1210 = vunpack.c.l.b16 %v1177
    %v1211 = vunpack.c.l.b16 %v1178
    %v1212 = vunpack.c.l.b16 %v1179
    %v1213 = vunpack.c.l.b16 %v1180
    %v1214 = vunpack.c.l.b16 %v1181
    %v1215 = vunpack.c.l.b16 %v1182
    %v1216 = vunpack.c.l.b16 %v1183
    %v1217 = vunpack.c.l.b16 %v1184
    %v1218 = vpack.c.b16 %v1203, %v1202
    %v1219 = vpack.c.b16 %v1205, %v1204
    %v1220 = vpack.c.b16 %v1207, %v1206
    %v1221 = vpack.c.b16 %v1209, %v1208
    %v1222 = vpack.c.b16 %v1211, %v1210
    %v1223 = vpack.c.b16 %v1213, %v1212
    %v1224 = vpack.c.b16 %v1215, %v1214
    %v1225 = vpack.c.b16 %v1217, %v1216
    %1234 = vmatprep.subr.bf16.mxu0 0
    %1235 = vmatpush1.bf16.msra.mxu0 %v1225
    %1236 = vmatprep.subr.bf16.mxu0 0
    %1237 = vmatpush1.bf16.msra.mxu0 %v1224
    %1238 = vmatprep.subr.bf16.mxu0 0
    %1239 = vmatpush1.bf16.msra.mxu0 %v1223
    %1240 = vmatprep.subr.bf16.mxu0 0
    %1241 = vmatpush1.bf16.msra.mxu0 %v1222
    %1242 = vmatprep.subr.bf16.mxu0 0
    %1243 = vmatpush1.bf16.msra.mxu0 %v1221
    %1244 = vmatprep.subr.bf16.mxu0 0
    %1245 = vmatpush1.bf16.msra.mxu0 %v1220
    %1246 = vmatprep.subr.bf16.mxu0 0
    %1247 = vmatpush1.bf16.msra.mxu0 %v1219
    %1248 = vmatprep.subr.bf16.mxu0 0
    %1249 = vmatpush1.bf16.msra.mxu0 %v1218
    %1250 = vmatprep.subr.bf16.mxu0 0
    %1251 = vmatpush2.bf16.msra.mxu0 0
    %1252 = vmatprep.subr.bf16.mxu0 0
    %1253 = vmatpush2.bf16.msra.mxu0 0
    %1254 = vmatprep.subr.bf16.mxu0 0
    %1255 = vmatpush2.bf16.msra.mxu0 0
    %1256 = vmatprep.subr.bf16.mxu0 0
    %1257 = vmatpush2.bf16.msra.mxu0 0
    %1258 = vmatprep.subr.bf16.mxu0 0
    %1259 = vmatpush2.bf16.msra.mxu0 0
    %1260 = vmatprep.subr.bf16.mxu0 0
    %1261 = vmatpush2.bf16.msra.mxu0 0
    %1262 = vmatprep.subr.bf16.mxu0 0
    %1263 = vmatpush2.bf16.msra.mxu0 0
    %1264 = vmatprep.subr.bf16.mxu0 0
    %1265 = vmatpush2.bf16.msra.mxu0 0
    %1266 = vmatprep.mubr.bf16.mxu0 0
    %1267 = vmatmul.mubr.bf16.gmra.mxu0 %v1185
    %v1268 = vpop.f32.mrf.mxu0
    %v1269 = vadd.f32 0.0, %v1268
    %v1270 = vpop.f32.mrf.mxu0
    %v1271 = vpop.f32.mrf.mxu0
    %v1272 = vpop.f32.mrf.mxu0
    %1273 = vdwg.mxu0
    %v1274 = vld [vmem:[%s1 + $0x6] ss:$0 sm:$0xff]
    %v1275 = vld [vmem:[%s1 + $0x7] ss:$0 sm:$0xff]
    %v1276 = vrot.slane %v1269, 4
    %v1277 = vadd.f32 %v1269, %v1276
    %v1278 = vrot.slane %v1277, 2
    %v1279 = vadd.f32 %v1277, %v1278
    %v1280 = vrot.slane %v1279, 1
    %v1281 = vadd.f32 %v1279, %v1280
    %v1282 = vmul.f32 %v1269, %v1269
    %v1283 = vrot.slane %v1282, 4
    %v1284 = vadd.f32 %v1282, %v1283
    %v1285 = vrot.slane %v1284, 2
    %v1286 = vadd.f32 %v1284, %v1285
    %v1287 = vrot.slane %v1286, 1
    %v1288 = vadd.f32 %v1286, %v1287
    %v1289 = vmul.f32 %v1281, 0.125
    %v1290 = vmul.f32 %v1288, 0.125
    %v1291 = vmul.f32 %v1289, %v1289
    %v1292 = vsub.f32 %v1290, %v1291
    %v1293 = vmax.f32 %v1292, 0.0
    %v1294 = vadd.f32 %v1293, 1e-05
    %v1295 = vrsqrt.pop %v1294
    %v1296 = vmul.f32 %v1274, %v1295
    %v1297 = vmul.f32 %v1289, %v1296
    %v1298 = vsub.f32 %v1275, %v1297
    %v1299 = vmul.f32 %v1269, %v1296
    %v1300 = vadd.f32 %v1299, %v1298
    %v1301 = vmax.f32 %v1300, 0.0
    %1302 = vst [vmem:[#allocation10] sm:$0xff] %v1301
    // Predicated region
    $region42: #{_forward_impl.1} parent=1 // pred_check
      _
    $region43: #{_forward_impl.1} parent=1 // pred_check_branch
      %1304 = sbr.rel (0) target = $region45
    $region44: #{_forward_impl.1} parent=1 // pred_region
      %s1306 = ssub.s32 128, 128
      %1307 = vsyncadd [#allocation4], %s1306
      %s1309 = sshll.u32 [#allocation10], 4
      %s1310 = int_to_ptr.vmem [resolvable:$true] %s1309
      %1312 = dma.vmem_to_hbm [thread:$0]  %s1310, 128, %s6, [#allocation4]
    $region45: #{_forward_impl.1} parent=1 // pred_fallthru
      _
    // Predicated region
    $region46: #{_forward_impl.1} parent=1 // pred_check
      _
    $region47: #{_forward_impl.1} parent=1 // pred_check_branch
      %1314 = sbr.rel (0) target = $region49
    $region48: #{_forward_impl.1} parent=1 // pred_region
      %1315 = dma.done [#allocation4], 128
    $region49: #{_forward_impl.1} parent=1 // pred_fallthru
      _
    %1316 = vsyncpa [#allocation3], 1
    %1317 = vsyncpa [#allocation6], 1
    %1318 = vsyncpa [#allocation9], 1
    %1319 = vsyncpa [#allocation4], 1

</llo_original>
